<compile_context>
chip_gen: v6e
topology: v6e:2x2x1
jax: 0.10.0
libtpu: 0.0.40
codegen_flags: <defaults>
</compile_context>

<pallas_src>
import math
import numpy as np
import jax
import jax.numpy as jnp
from jax.experimental import pallas as pl
from jax.experimental.pallas import tpu as pltpu


# ---------------------------------------------------------------------------
# Deterministic parameter construction (mirrors build_ordered_filter_map)
# ---------------------------------------------------------------------------
_ALL_TOP_X = [0, 0, 6, 0, 0, 1, 1, 4, 5, 1, 3, 0, 0, 0, 3, 2,
              4, 6, 3, 5, 5, 2, 6, 5, 5, 3, 3, 4, 2, 2, 6, 1]
_ALL_TOP_Y = [0, 1, 0, 5, 2, 0, 2, 0, 0, 6, 0, 4, 6, 3, 5, 2,
              6, 3, 3, 3, 5, 1, 1, 2, 4, 2, 1, 1, 3, 0, 5, 3]
_NUM_FREQ = 16


def _build_filter(pos, freq, POS):
    result = math.cos(math.pi * freq * (pos + 0.5) / POS) / math.sqrt(POS)
    return result if freq == 0 else result * math.sqrt(2)


def _build_dct_filters(hw):
    """Returns (num_freq, hw, hw) float32 DCT basis filters."""
    mapper_x = _ALL_TOP_X[:_NUM_FREQ]
    mapper_y = _ALL_TOP_Y[:_NUM_FREQ]
    filt = np.zeros((_NUM_FREQ, hw, hw), dtype=np.float32)
    scale = hw // 7
    for i, (ux, vy) in enumerate(zip(mapper_x, mapper_y)):
        u_x = ux * scale
        v_y = vy * scale
        for tx in range(hw):
            for ty in range(hw):
                filt[i, tx, ty] = (_build_filter(tx, u_x, hw) *
                                   _build_filter(ty, v_y, hw))
    return filt


def make_dct_weight(channel, size):
    """(1, C, size, size) weight; each of 16 freq filters repeated C//16 times."""
    assert size in (56, 28, 14, 7), "size must be one of 56/28/14/7"
    assert channel % _NUM_FREQ == 0, "channel must be divisible by 16"
    filt = _build_dct_filters(size)                    # (16, hw, hw)
    idx = []
    for j in range(_NUM_FREQ):
        idx += [j] * (channel // _NUM_FREQ)
    w = filt[np.array(idx)]                            # (C, hw, hw)
    return jnp.asarray(w[None], dtype=jnp.float32)     # (1, C, hw, hw)


def _round_up(a, b):
    return -(-a // b) * b


def _vmem_capacity_bytes():
    """Physical VMEM of the current chip (conservative fallback = v7x 64 MiB)."""
    try:
        cap = int(pltpu.get_tpu_info().vmem_capacity_bytes)
        if cap > 0:
            return cap
    except Exception:
        pass
    return 64 << 20


def _pick_batch_tile(n, per_img_bytes, target_bytes):
    """Images per grid step: <= target bytes, >= min(4, N) steps, divisor of N."""
    per_img_bytes = max(1, int(per_img_bytes))
    tn = min(n, max(1, int(target_bytes) // per_img_bytes))
    want_steps = min(4, n)        # >= 2 steps per TensorCore on v7x when N allows
    if n // tn < want_steps:
        # shrink to restore pipelining, but keep tiles >= ~1 MiB (or >= target)
        floor_tn = max(1, min(int(target_bytes), 1 << 20) // per_img_bytes)
        tn = max(n // want_steps, min(floor_tn, tn))
        tn = max(1, min(tn, n))
    # snap to a divisor of N: no padded HBM copy of x, no partial blocks
    while n % tn:
        tn -= 1
    return tn


# ---------------------------------------------------------------------------
# Pallas kernel:  out[n, c] = sum_hw x[n, c, hw] * w[c, hw]
# ---------------------------------------------------------------------------
def _dct_reduce_kernel(x_ref, w_ref, o_ref):
    # x_ref: (TN, C, HW) native dtype   w_ref: (C, HW) f32   o_ref: (TN, C)
    x = x_ref[...].astype(jnp.float32)          # promote in-kernel; f32 accumulate
    o_ref[...] = jnp.sum(x * w_ref[...], axis=-1).astype(o_ref.dtype)


def dct_reduce(x, dct_weight, *, target_x_tile_bytes=None):
    """x: (N, C, H, W), dct_weight: (1, C, H, W) -> (N, C, 1, 1)."""
    N, C, H, W = x.shape
    HW = H * W
    assert N >= 1
    assert dct_weight.shape[-3:] == (C, H, W)

    x_flat = x.reshape(N, C, HW)                               # metadata-only
    w_full = dct_weight.reshape(C, HW).astype(jnp.float32)     # tiny, DMA'd once
    out_dtype = jnp.result_type(x.dtype, dct_weight.dtype)

    vmem_cap = _vmem_capacity_bytes()
    if target_x_tile_bytes is None:
        # bigger tiles on 128 MiB-VMEM chips (v5e/v6e); 6 MiB on v7x (64 MiB/TC)
        target_x_tile_bytes = (12 << 20) if vmem_cap > (64 << 20) else (6 << 20)

    # ---- tile selection (x stays in its native dtype on the wire) ----------
    x_elt = jnp.dtype(x.dtype).itemsize
    sub_x = max(8, 32 // max(1, x_elt))          # sublane multiple for packed dtypes
    hw_pad = _round_up(HW, 128)                  # lane padding in VMEM
    per_img_vmem = _round_up(C, sub_x) * hw_pad * x_elt
    TN = _pick_batch_tile(N, per_img_vmem, target_x_tile_bytes)
    num_blocks = N // TN                         # TN divides N -> no pad pass

    # ---- explicit VMEM budget: double-buffered x/out tiles + resident weight
    #      + headroom for the in-kernel f32 upcast of the x tile -------------
    x_tile_b = TN * per_img_vmem
    w_b = _round_up(C, 8) * hw_pad * 4
    out_b = _round_up(TN, 8) * _round_up(C, 128) * 4
    x_tile_f32_b = TN * _round_up(C, 8) * hw_pad * 4
    vmem_limit = 2 * x_tile_b + 2 * w_b + 2 * out_b + x_tile_f32_b + (4 << 20)
    vmem_limit = int(min(max(vmem_limit, 16 << 20), (vmem_cap * 3) // 4))

    out = pl.pallas_call(
        _dct_reduce_kernel,
        out_shape=jax.ShapeDtypeStruct((num_blocks, TN, C), out_dtype),
        grid_spec=pltpu.PrefetchScalarGridSpec(
            num_scalar_prefetch=0,
            grid=(num_blocks,),
            in_specs=[
                pl.BlockSpec((TN, C, HW), lambda n: (n, 0, 0)),   # native dtype
                pl.BlockSpec((C, HW), lambda n: (0, 0)),          # resident weight
            ],
            out_specs=pl.BlockSpec((None, TN, C), lambda n: (n, 0, 0)),
        ),
        compiler_params=pltpu.CompilerParams(
            dimension_semantics=("parallel",),
            vmem_limit_bytes=vmem_limit,
        ),
    )(x_flat, w_full)

    # num_blocks * TN == N exactly -> metadata-only reshape, no slicing/copy.
    return out.reshape(N, C, 1, 1)


# ---------------------------------------------------------------------------
# Demo / self-check
# ---------------------------------------------------------------------------
if __name__ == "__main__":
    batch, channel, size = 4, 16, 14      # NCHW input: (4, 16, 14, 14)

    key = jax.random.PRNGKey(0)
    x = jax.random.normal(key, (batch, channel, size, size), dtype=jnp.float32)
    dct_weight = make_dct_weight(channel, size)          # (1, C, size, size)

    # Pure-JAX reference of the PyTorch forward.
    y_ref = jnp.sum(x * dct_weight, axis=(2, 3), keepdims=True)

    # 1) default tiling (whole batch fits in one step at this tiny size)
    y = jax.block_until_ready(dct_reduce(x, dct_weight))
    np.testing.assert_allclose(np.asarray(y), np.asarray(y_ref),
                               rtol=1e-5, atol=1e-5)
    assert y.shape == (batch, channel, 1, 1)

    # 2) force a multi-step grid to exercise the batched index_map / pipelining
    y_multi = jax.block_until_ready(
        dct_reduce(x, dct_weight, target_x_tile_bytes=8 << 10))
    np.testing.assert_allclose(np.asarray(y_multi), np.asarray(y_ref),
                               rtol=1e-5, atol=1e-5)

    # 3) native-dtype (bf16) path: no wrapper-side upcast, f32 accumulation
    x_bf16 = x.astype(jnp.bfloat16)
    y_bf16 = jax.block_until_ready(dct_reduce(x_bf16, dct_weight))
    y_bf16_ref = jnp.sum(x_bf16.astype(jnp.float32) * dct_weight,
                         axis=(2, 3), keepdims=True)
    np.testing.assert_allclose(np.asarray(y_bf16), np.asarray(y_bf16_ref),
                               rtol=1e-4, atol=1e-4)

    print("KERNEL_OK")
</pallas_src>

<mosaic_0001>
module attributes {stable_mosaic.version = 11 : i64} {
  func.func @_dct_reduce_kernel(%arg0: i32, %arg1: memref<4x16x196xf32, #tpu.memory_space<vmem>>, %arg2: memref<16x196xf32, #tpu.memory_space<vmem>>, %arg3: memref<1x4x16xf32, #tpu.memory_space<vmem>>) attributes {dimension_semantics = [#tpu.dimension_semantics<parallel>], iteration_bounds = array<i64: 1>, scalar_prefetch = 0 : i64, scratch_operands = 0 : i64, tpu.core_type = #tpu.core_type<tc>, window_params = [{transform_indices = @transform_0, window_bounds = array<i64: 4, 16, 196>}, {pipeline_mode = #tpu.pipeline_mode<synchronous>, transform_indices = @transform_1, window_bounds = array<i64: 16, 196>}, {transform_indices = @transform_2, window_bounds = array<i64: 1, 4, 16>}]} {
    %c0 = arith.constant 0 : index
    %c0_0 = arith.constant 0 : index
    %c0_1 = arith.constant 0 : index
    %0 = vector.load %arg1[%c0, %c0_0, %c0_1] : memref<4x16x196xf32, #tpu.memory_space<vmem>>, vector<4x16x196xf32>
    %c0_2 = arith.constant 0 : index
    %c0_3 = arith.constant 0 : index
    %1 = vector.load %arg2[%c0_2, %c0_3] : memref<16x196xf32, #tpu.memory_space<vmem>>, vector<16x196xf32>
    %2 = vector.shape_cast %1 : vector<16x196xf32> to vector<1x16x196xf32>
    %3 = vector.broadcast %2 : vector<1x16x196xf32> to vector<4x16x196xf32>
    %4 = arith.mulf %0, %3 : vector<4x16x196xf32>
    %cst = arith.constant dense<0.000000e+00> : vector<4x16xf32>
    %5 = vector.multi_reduction <add>, %4, %cst [2] : vector<4x16x196xf32> to vector<4x16xf32>
    %c0_4 = arith.constant 0 : index
    %c0_5 = arith.constant 0 : index
    %c0_6 = arith.constant 0 : index
    %6 = vector.load %arg3[%c0_4, %c0_5, %c0_6] : memref<1x4x16xf32, #tpu.memory_space<vmem>>, vector<1x4x16xf32>
    %7 = vector.shape_cast %6 : vector<1x4x16xf32> to vector<4x16xf32>
    %8 = vector.shape_cast %5 : vector<4x16xf32> to vector<1x4x16xf32>
    tpu.vector_store %arg3[%c0_4, %c0_5, %c0_6], %8 {strides = array<i32>} : memref<1x4x16xf32, #tpu.memory_space<vmem>>, vector<1x4x16xf32>,
    return
  }
  func.func @transform_0(%arg0: i32) -> (i32, i32, i32) {
    %c0_i32 = arith.constant 0 : i32
    %c0_i32_0 = arith.constant 0 : i32
    %c0_i32_1 = arith.constant 0 : i32
    return %arg0, %c0_i32, %c0_i32_0 : i32, i32, i32
  }
  func.func @transform_1(%arg0: i32) -> (i32, i32) {
    %c0_i32 = arith.constant 0 : i32
    %c0_i32_0 = arith.constant 0 : i32
    %c0_i32_1 = arith.constant 0 : i32
    return %c0_i32, %c0_i32_0 : i32, i32
  }
  func.func @transform_2(%arg0: i32) -> (i32, i32, i32) {
    %c0_i32 = arith.constant 0 : i32
    %c0_i32_0 = arith.constant 0 : i32
    %c0_i32_1 = arith.constant 0 : i32
    return %arg0, %c0_i32, %c0_i32_0 : i32, i32, i32
  }
}

</mosaic_0001>

<llo_original>
// kernel: tpu_custom_call.1
$region0: #{tpu_custom_call.1}
  #allocation0 [shape = 'u32[]', space=smem, size = 0x4, offset = 0x4, fixed_abs, tag = 'smem constant byte address 0x4 - core index']
  #allocation1 [shape = 'u32[144,128]{1,0:T(1,128)}', space=vmem, size = 0x12000, scoped, tag = 'internal scratch']
  %s0 = inlined_call_operand.hbm [shape: f32[4,16,196], index: 0, kind: input, shape index: {}]
  %s1 = inlined_call_operand.hbm [shape: f32[16,196], index: 1, kind: input, shape index: {}]
  %s2 = inlined_call_operand.hbm [shape: f32[1,4,16], index: 2, kind: output, shape index: {}]
  %s3 = sld [smem:[#allocation0]]
  $region26: #{tpu_custom_call.1} parent=0
    _
  %s5 = ssub.s32 1, %s3
  %s6 = scalar_select 0, %s5, %s3
  $region1: #{tpu_custom_call.1} parent=0
    #allocation2 [shape = 'u8[65536]{0}', space=vmem, size = 0x10000, scoped, tag = 'input window, operand 0, single buffered']
    #allocation3 [shape = 's32[1]{0}', space=sflag, size = 0x4, scoped, tag = 'scoped memory for tpu_custom_call.1']
    #allocation4 [shape = 's32[1]{0}', space=sflag, size = 0x4, scoped, tag = 'scoped memory for tpu_custom_call.1']
    #allocation5 [shape = 'u8[16384]{0}', space=vmem, size = 0x4000, scoped, tag = 'input window, operand 1, single buffered']
    #allocation6 [shape = 's32[1]{0}', space=sflag, size = 0x4, scoped, tag = 'scoped memory for tpu_custom_call.1']
    #allocation7 [shape = 'u8[2048]{0}', space=vmem, size = 0x800, scoped, tag = 'output window, operand 0, single buffered']
    %7 = vsyncpa [#allocation3], 0
    %8 = vsyncpa [#allocation6], 0
    %9 = vsyncpa [#allocation4], 0
    // Predicated region
    $region2: #{tpu_custom_call.1} parent=1 // pred_check
      _
    $region3: #{tpu_custom_call.1} parent=1 // pred_check_branch
      %11 = sbr.rel (0) target = $region5
    $region4: #{tpu_custom_call.1} parent=1 // pred_region
      %s13 = ssub.s32 2048, 2048
      %14 = vsyncadd [#allocation3], %s13
      %s15 = sshll.u32 [#allocation2], 4
      %s16 = int_to_ptr.vmem [resolvable:$true] %s15
      %21 = dma.hbm_to_vmem [thread:$0]  %s0, 2048, %s16, [#allocation3], 256, 256, 16
    $region5: #{tpu_custom_call.1} parent=1 // pred_fallthru
      _
    // Predicated region
    $region6: #{tpu_custom_call.1} parent=1 // pred_check
      _
    $region7: #{tpu_custom_call.1} parent=1 // pred_check_branch
      %23 = sbr.rel (0) target = $region9
    $region8: #{tpu_custom_call.1} parent=1 // pred_region
      %s25 = ssub.s32 512, 512
      %26 = vsyncadd [#allocation6], %s25
      %s27 = sshll.u32 [#allocation5], 4
      %s28 = int_to_ptr.vmem [resolvable:$true] %s27
      %33 = dma.hbm_to_vmem [thread:$0]  %s1, 512, %s28, [#allocation6], 256, 256, 16
    $region9: #{tpu_custom_call.1} parent=1 // pred_fallthru
      _
    // Predicated region
    $region10: #{tpu_custom_call.1} parent=1 // pred_check
      _
    $region11: #{tpu_custom_call.1} parent=1 // pred_check_branch
      %35 = sbr.rel (0) target = $region13
    $region12: #{tpu_custom_call.1} parent=1 // pred_region
      %36 = dma.done [#allocation3], 2048
    $region13: #{tpu_custom_call.1} parent=1 // pred_fallthru
      _
    // Predicated region
    $region14: #{tpu_custom_call.1} parent=1 // pred_check
      _
    $region15: #{tpu_custom_call.1} parent=1 // pred_check_branch
      %38 = sbr.rel (0) target = $region17
    $region16: #{tpu_custom_call.1} parent=1 // pred_region
      %39 = dma.done [#allocation6], 512
    $region17: #{tpu_custom_call.1} parent=1 // pred_fallthru
      _
    %v40 = vld [vmem:[#allocation2] sm:$0xff]
    %v41 = vld [vmem:[#allocation2 + $0x8] sm:$0xff]
    %v42 = vld [vmem:[#allocation2 + $0x10] sm:$0xff]
    %v43 = vld [vmem:[#allocation2 + $0x18] sm:$0xff]
    %v44 = vld [vmem:[#allocation2 + $0x20] sm:$0xff]
    %v45 = vld [vmem:[#allocation2 + $0x28] sm:$0xff]
    %v46 = vld [vmem:[#allocation2 + $0x30] sm:$0xff]
    %v47 = vld [vmem:[#allocation2 + $0x38] sm:$0xff]
    %v48 = vld [vmem:[#allocation2 + $0x40] sm:$0xff]
    %v49 = vld [vmem:[#allocation2 + $0x48] sm:$0xff]
    %v50 = vld [vmem:[#allocation2 + $0x50] sm:$0xff]
    %v51 = vld [vmem:[#allocation2 + $0x58] sm:$0xff]
    %v52 = vld [vmem:[#allocation2 + $0x60] sm:$0xff]
    %v53 = vld [vmem:[#allocation2 + $0x68] sm:$0xff]
    %v54 = vld [vmem:[#allocation2 + $0x70] sm:$0xff]
    %v55 = vld [vmem:[#allocation2 + $0x78] sm:$0xff]
    %v56 = vld [vmem:[#allocation5] sm:$0xff]
    %v57 = vld [vmem:[#allocation5 + $0x8] sm:$0xff]
    %v58 = vld [vmem:[#allocation5 + $0x10] sm:$0xff]
    %v59 = vld [vmem:[#allocation5 + $0x18] sm:$0xff]
    %v60 = vmul.f32 %v40, %v56
    %v61 = vmul.f32 %v41, %v57
    %v62 = vmul.f32 %v42, %v58
    %v63 = vmul.f32 %v43, %v59
    %v64 = vmul.f32 %v44, %v56
    %v65 = vmul.f32 %v45, %v57
    %v66 = vmul.f32 %v46, %v58
    %v67 = vmul.f32 %v47, %v59
    %v68 = vmul.f32 %v48, %v56
    %v69 = vmul.f32 %v49, %v57
    %v70 = vmul.f32 %v50, %v58
    %v71 = vmul.f32 %v51, %v59
    %v72 = vmul.f32 %v52, %v56
    %v73 = vmul.f32 %v53, %v57
    %v74 = vmul.f32 %v54, %v58
    %v75 = vmul.f32 %v55, %v59
    %vm76 = vcmask 556032
    %v77 = vsel %vm76, %v61, 0.0
    %v78 = vadd.f32 %v60, %v77
    %79 = vadd.xlane.f32.xlu0 %v78
    %v80 = vpop.xlane.xlu0 %79
    %v81 = vsel %vm76, %v63, 0.0
    %v82 = vadd.f32 %v62, %v81
    %83 = vadd.xlane.f32.xlu0 %v82
    %v84 = vpop.xlane.xlu0 %83
    %v85 = vsel %vm76, %v65, 0.0
    %v86 = vadd.f32 %v64, %v85
    %87 = vadd.xlane.f32.xlu0 %v86
    %v88 = vpop.xlane.xlu0 %87
    %v89 = vsel %vm76, %v67, 0.0
    %v90 = vadd.f32 %v66, %v89
    %91 = vadd.xlane.f32.xlu0 %v90
    %v92 = vpop.xlane.xlu0 %91
    %v93 = vsel %vm76, %v69, 0.0
    %v94 = vadd.f32 %v68, %v93
    %95 = vadd.xlane.f32.xlu0 %v94
    %v96 = vpop.xlane.xlu0 %95
    %v97 = vsel %vm76, %v71, 0.0
    %v98 = vadd.f32 %v70, %v97
    %99 = vadd.xlane.f32.xlu0 %v98
    %v100 = vpop.xlane.xlu0 %99
    %v101 = vsel %vm76, %v73, 0.0
    %v102 = vadd.f32 %v72, %v101
    %103 = vadd.xlane.f32.xlu0 %v102
    %v104 = vpop.xlane.xlu0 %103
    %v105 = vsel %vm76, %v75, 0.0
    %v106 = vadd.f32 %v74, %v105
    %107 = vadd.xlane.f32.xlu0 %v106
    %v108 = vpop.xlane.xlu0 %107
    %v117 = vlaneseq
    %v118 = vand.u32 %v117, 127
    %v119 = vlaneseq
    %v120 = vshrl.u32 %v119, 7
    %v121 = vsub.s32 %v118, %v120
    %v122 = vrot.slane %v80, %v121
    %v123 = vadd.s32 %v118, 4294967288
    %v124 = vlaneseq
    %v125 = vshrl.u32 %v124, 7
    %v126 = vsub.s32 %v123, %v125
    %v127 = vrot.slane %v84, %v126
    %vm128 = vcmask 130112
    %v129 = vsel %vm128, %v127, %v122
    %v130 = vlaneseq
    %v131 = vshrl.u32 %v130, 7
    %v132 = vsub.s32 %v118, %v131
    %v133 = vrot.slane %v88, %v132
    %v134 = vlaneseq
    %v135 = vshrl.u32 %v134, 7
    %v136 = vsub.s32 %v123, %v135
    %v137 = vrot.slane %v92, %v136
    %v138 = vsel %vm128, %v137, %v133
    %v139 = vlaneseq
    %v140 = vshrl.u32 %v139, 7
    %v141 = vsub.s32 %v118, %v140
    %v142 = vrot.slane %v96, %v141
    %v143 = vlaneseq
    %v144 = vshrl.u32 %v143, 7
    %v145 = vsub.s32 %v123, %v144
    %v146 = vrot.slane %v100, %v145
    %v147 = vsel %vm128, %v146, %v142
    %v148 = vlaneseq
    %v149 = vshrl.u32 %v148, 7
    %v150 = vsub.s32 %v118, %v149
    %v151 = vrot.slane %v104, %v150
    %v152 = vlaneseq
    %v153 = vshrl.u32 %v152, 7
    %v154 = vsub.s32 %v123, %v153
    %v155 = vrot.slane %v108, %v154
    %v156 = vsel %vm128, %v155, %v151
    %vm157 = vcmask 1041409
    %v158 = vsel %vm157, %v138, %v129
    %vm159 = vcmask 1042434
    %v160 = vsel %vm159, %v147, %v158
    %vm161 = vcmask 1043459
    %v162 = vsel %vm161, %v156, %v160
    %vm164 = vcmask 125952
    %165 = vst.msk [vmem:[#allocation7] sm:$0xf] %vm164, %v162
    // Predicated region
    $region18: #{tpu_custom_call.1} parent=1 // pred_check
      _
    $region19: #{tpu_custom_call.1} parent=1 // pred_check_branch
      %167 = sbr.rel (0) target = $region21
    $region20: #{tpu_custom_call.1} parent=1 // pred_region
      %s169 = ssub.s32 64, 64
      %170 = vsyncadd [#allocation4], %s169
      %s172 = sshll.u32 [#allocation7], 4
      %s173 = int_to_ptr.vmem [resolvable:$true] %s172
      %175 = dma.vmem_to_hbm [thread:$0]  %s173, 64, %s2, [#allocation4]
    $region21: #{tpu_custom_call.1} parent=1 // pred_fallthru
      _
    // Predicated region
    $region22: #{tpu_custom_call.1} parent=1 // pred_check
      _
    $region23: #{tpu_custom_call.1} parent=1 // pred_check_branch
      %177 = sbr.rel (0) target = $region25
    $region24: #{tpu_custom_call.1} parent=1 // pred_region
      %178 = dma.done [#allocation4], 64
    $region25: #{tpu_custom_call.1} parent=1 // pred_fallthru
      _
    %179 = vsyncpa [#allocation3], 1
    %180 = vsyncpa [#allocation6], 1
    %181 = vsyncpa [#allocation4], 1

</llo_original>
